<compile_context>
chip_gen: v6e
topology: v6e:2x2x1
jax: 0.10.0
libtpu: 0.0.40
codegen_flags: <defaults>
</compile_context>

<pallas_src>
import functools

import jax
import jax.numpy as jnp
from jax.experimental import pallas as pl
from jax.experimental.pallas import tpu as pltpu


def _round_up(n, m):
    return ((n + m - 1) // m) * m


def _fc3_on_mxu_default():
    # Keep the VPU+XLU fc3 reduction on v5-class chips (MRF pop path makes a dependent
    # second matmul more serializing); use the MXU on v6e/v7x where VALU binds first.
    try:
        kind = jax.devices()[0].device_kind.lower()
    except Exception:
        return True
    return "v5" not in kind


def mlp_kernel(xT_ref, w1_ref, b1_ref, w2_ref, b2_ref, w3_ref, b3_ref, o_ref, *, fc3_on_mxu):
    # xT_ref: (2, TB)            batch on lanes
    # w1_ref: (32, 2)    b1_ref: (32, 1)
    # w2_ref: (128, 32)  b2_ref: (128, 1)
    # w3_ref: (1, 128) if fc3_on_mxu else (128, 1)
    # b3_ref: (1, 1) scalar in SMEM
    xT = xT_ref[...]
    w1 = w1_ref[...]

    # fc1 + ReLU: K=2 contraction -> two VPU broadcast multiply-adds (keeps the MXU free).
    h1 = w1[:, 0:1] * xT[0:1, :] + w1[:, 1:2] * xT[1:2, :] + b1_ref[...]
    h1 = jnp.maximum(h1, 0.0)                                   # (32, TB)

    # fc2 + ReLU: the main MXU matmul, (128,32) @ (32,TB), f32 accumulate.
    h2 = jnp.dot(w2_ref[...], h1, preferred_element_type=jnp.float32) + b2_ref[...]
    h2 = jnp.maximum(h2, 0.0)                                   # (128, TB)

    if fc3_on_mxu:
        # v6e/v7x: offload the K=128 reduction to the (underutilized) MXU, relieving
        # the VALU slot that saturates first at large TB.
        h3 = jnp.dot(w3_ref[...], h2, preferred_element_type=jnp.float32) + b3_ref[0, 0]
    else:
        # v5e: VPU multiply + sublane (XLU) reduction; avoids a second dependent MXU drain.
        h3 = jnp.sum(h2 * w3_ref[...], axis=0, keepdims=True) + b3_ref[0, 0]

    o_ref[...] = h3.astype(o_ref.dtype)                         # (1, TB) lane-dense store


@functools.partial(
    jax.jit, static_argnames=("block_batch", "fc3_on_mxu", "x_is_feature_major")
)
def _net_b_forward_impl(x, w1, b1, w2, b2, w3, b3, *, block_batch, fc3_on_mxu,
                        x_is_feature_major):
    # Lane-dense layout: batch on the lane axis.
    xT = x if x_is_feature_major else x.T                       # (2, B)
    B = xT.shape[1]

    # Batch tile: multiple of 128 (lane width); amortize per-grid-step overhead.
    tb = min(_round_up(block_batch, 128), _round_up(B, 128))
    if B >= 256:
        # Guarantee >= 2 grid blocks so both v7x TensorCores get work.
        tb = min(tb, _round_up(pl.cdiv(B, 2), 128))
    tb = min(tb, 16384)                                          # v7x VMEM headroom cap
    n_blocks = pl.cdiv(B, tb)                                    # ragged last block is fine

    # Rough per-step VMEM estimate: h1 + h2 temporaries + double-buffered xT/out + params.
    vmem_est = 4 * tb * (32 + 128 + 2 * (2 + 1)) + (1 << 16)
    vmem_limit = int(1.5 * vmem_est) if vmem_est > 8 * 1024 * 1024 else None

    b1c = b1.reshape(-1, 1)                                      # (32, 1)
    b2c = b2.reshape(-1, 1)                                      # (128, 1)
    b3s = b3.reshape(1, 1)                                       # scalar -> SMEM
    if fc3_on_mxu:
        w3k = w3.reshape(1, -1)                                  # (1, 128) MXU row
        w3_spec_shape = (1, 128)
    else:
        w3k = w3.reshape(-1, 1)                                  # (128, 1) VPU column
        w3_spec_shape = (128, 1)

    const = lambda shape: pl.BlockSpec(shape, lambda i: (0, 0))  # VMEM-resident params

    out = pl.pallas_call(
        functools.partial(mlp_kernel, fc3_on_mxu=fc3_on_mxu),
        out_shape=jax.ShapeDtypeStruct((1, B), jnp.float32),
        grid_spec=pltpu.PrefetchScalarGridSpec(
            num_scalar_prefetch=0,
            grid=(n_blocks,),
            in_specs=[
                pl.BlockSpec((2, tb), lambda i: (0, i)),         # x^T streamed over batch
                const((32, 2)),                                  # w1
                const((32, 1)),                                  # b1
                const((128, 32)),                                # w2
                const((128, 1)),                                 # b2
                const(w3_spec_shape),                            # w3
                pl.BlockSpec(memory_space=pltpu.MemorySpace.SMEM),  # b3 scalar
            ],
            out_specs=pl.BlockSpec((1, tb), lambda i: (0, i)),   # lane-dense output blocks
        ),
        compiler_params=pltpu.CompilerParams(
            dimension_semantics=("parallel",),                   # shard batch over 2 TCs (v7x)
            vmem_limit_bytes=vmem_limit,
        ),
    )(xT, w1, b1c, w2, b2c, w3k, b3s)

    return out.reshape(B, 1)


def net_b_forward(x, w1, b1, w2, b2, w3, b3, *, block_batch=4096, fc3_on_mxu=None,
                  x_is_feature_major=False):
    """Forward pass of Net_b.

    x: (B, 2) float32 (or (2, B) if x_is_feature_major). Params in PyTorch layout:
    w1 (32,2), b1 (32,), w2 (128,32), b2 (128,), w3 (1,128), b3 (1,).
    Returns (B, 1) float32.
    """
    if fc3_on_mxu is None:
        fc3_on_mxu = _fc3_on_mxu_default()
    return _net_b_forward_impl(
        x, w1, b1, w2, b2, w3, b3,
        block_batch=block_batch, fc3_on_mxu=fc3_on_mxu,
        x_is_feature_major=x_is_feature_major)


def init_linear_params(key, fan_in, fan_out):
    # Deterministic, PyTorch-style uniform(-1/sqrt(fan_in), 1/sqrt(fan_in)).
    kw, kb = jax.random.split(key)
    bound = 1.0 / jnp.sqrt(float(fan_in))
    # PyTorch layout: weight (out, in), bias (out,)
    w = jax.random.uniform(kw, (fan_out, fan_in), jnp.float32, -bound, bound)
    b = jax.random.uniform(kb, (fan_out,), jnp.float32, -bound, bound)
    return w, b


if __name__ == "__main__":
    key = jax.random.PRNGKey(0)
    k_x, k1, k2, k3 = jax.random.split(key, 4)

    # B=300 exercises: >=2 grid blocks (both TCs on v7x) and a ragged last block (no pad).
    B = 300
    x = jax.random.normal(k_x, (B, 2), jnp.float32)

    w1, b1 = init_linear_params(k1, 2, 32)
    w2, b2 = init_linear_params(k2, 32, 128)
    w3, b3 = init_linear_params(k3, 128, 1)

    # plain-JAX reference (highest precision so the comparison isolates kernel error)
    hp = jax.lax.Precision.HIGHEST
    ref = jnp.maximum(jnp.dot(x, w1.T, precision=hp) + b1, 0.0)
    ref = jnp.maximum(jnp.dot(ref, w2.T, precision=hp) + b2, 0.0)
    ref = jnp.dot(ref, w3.T, precision=hp) + b3

    # Exercise both fc3 paths (MXU on v6e/v7x default, VPU+XLU on v5e default).
    for fc3_mode in (True, False):
        out = net_b_forward(x, w1, b1, w2, b2, w3, b3, fc3_on_mxu=fc3_mode)
        out = jax.block_until_ready(out)
        assert out.shape == (B, 1)
        err = float(jnp.max(jnp.abs(out - ref)))
        assert jnp.allclose(out, ref, atol=1e-4, rtol=1e-4), (fc3_mode, err)

    # Auto-selected path (device-kind based) sanity check.
    out = jax.block_until_ready(net_b_forward(x, w1, b1, w2, b2, w3, b3))
    assert out.shape == (B, 1)
    assert jnp.allclose(out, ref, atol=1e-4, rtol=1e-4)

    print("KERNEL_OK")
</pallas_src>

<mosaic_0001>
module attributes {stable_mosaic.version = 11 : i64} {
  func.func @mlp_kernel(%arg0: i32, %arg1: memref<2x256xf32, #tpu.memory_space<vmem>>, %arg2: memref<32x2xf32, #tpu.memory_space<vmem>>, %arg3: memref<32x1xf32, #tpu.memory_space<vmem>>, %arg4: memref<128x32xf32, #tpu.memory_space<vmem>>, %arg5: memref<128x1xf32, #tpu.memory_space<vmem>>, %arg6: memref<1x128xf32, #tpu.memory_space<vmem>>, %arg7: memref<1x1xf32, #tpu.memory_space<smem>>, %arg8: memref<1x256xf32, #tpu.memory_space<vmem>>) attributes {dimension_semantics = [#tpu.dimension_semantics<parallel>], iteration_bounds = array<i64: 2>, scalar_prefetch = 0 : i64, scratch_operands = 0 : i64, tpu.core_type = #tpu.core_type<tc>, window_params = [{transform_indices = @transform_0, window_bounds = array<i64: 2, 256>}, {pipeline_mode = #tpu.pipeline_mode<synchronous>, transform_indices = @transform_1, window_bounds = array<i64: 32, 2>}, {pipeline_mode = #tpu.pipeline_mode<synchronous>, transform_indices = @transform_2, window_bounds = array<i64: 32, 1>}, {pipeline_mode = #tpu.pipeline_mode<synchronous>, transform_indices = @transform_3, window_bounds = array<i64: 128, 32>}, {pipeline_mode = #tpu.pipeline_mode<synchronous>, transform_indices = @transform_4, window_bounds = array<i64: 128, 1>}, {pipeline_mode = #tpu.pipeline_mode<synchronous>, transform_indices = @transform_5, window_bounds = array<i64: 1, 128>}, {transform_indices = @transform_6, window_bounds = array<i64: 1, 1>}, {transform_indices = @transform_7, window_bounds = array<i64: 1, 256>}]} {
    %c0 = arith.constant 0 : index
    %c0_0 = arith.constant 0 : index
    %0 = vector.load %arg1[%c0, %c0_0] : memref<2x256xf32, #tpu.memory_space<vmem>>, vector<2x256xf32>
    %c0_1 = arith.constant 0 : index
    %c0_2 = arith.constant 0 : index
    %1 = vector.load %arg2[%c0_1, %c0_2] : memref<32x2xf32, #tpu.memory_space<vmem>>, vector<32x2xf32>
    %2 = vector.extract_strided_slice %1 {offsets = [0, 0], sizes = [32, 1], strides = [1, 1]} : vector<32x2xf32> to vector<32x1xf32>
    %3 = vector.extract_strided_slice %0 {offsets = [0, 0], sizes = [1, 256], strides = [1, 1]} : vector<2x256xf32> to vector<1x256xf32>
    %4 = vector.broadcast %2 : vector<32x1xf32> to vector<32x256xf32>
    %5 = vector.broadcast %3 : vector<1x256xf32> to vector<32x256xf32>
    %6 = arith.mulf %4, %5 : vector<32x256xf32>
    %7 = vector.extract_strided_slice %1 {offsets = [0, 1], sizes = [32, 1], strides = [1, 1]} : vector<32x2xf32> to vector<32x1xf32>
    %8 = vector.extract_strided_slice %0 {offsets = [1, 0], sizes = [1, 256], strides = [1, 1]} : vector<2x256xf32> to vector<1x256xf32>
    %9 = vector.broadcast %7 : vector<32x1xf32> to vector<32x256xf32>
    %10 = vector.broadcast %8 : vector<1x256xf32> to vector<32x256xf32>
    %11 = arith.mulf %9, %10 : vector<32x256xf32>
    %12 = arith.addf %6, %11 : vector<32x256xf32>
    %c0_3 = arith.constant 0 : index
    %c0_4 = arith.constant 0 : index
    %13 = vector.load %arg3[%c0_3, %c0_4] : memref<32x1xf32, #tpu.memory_space<vmem>>, vector<32x1xf32>
    %14 = vector.broadcast %13 : vector<32x1xf32> to vector<32x256xf32>
    %15 = arith.addf %12, %14 : vector<32x256xf32>
    %cst = arith.constant 0.000000e+00 : f32
    %16 = vector.broadcast %cst : f32 to vector<32x256xf32>
    %17 = arith.maximumf %15, %16 : vector<32x256xf32>
    %c0_5 = arith.constant 0 : index
    %c0_6 = arith.constant 0 : index
    %18 = vector.load %arg4[%c0_5, %c0_6] : memref<128x32xf32, #tpu.memory_space<vmem>>, vector<128x32xf32>
    %cst_7 = arith.constant dense<0.000000e+00> : vector<128x256xf32>
    %19 = tpu.matmul %18, %17, %cst_7 {dimension_numbers = #tpu.dot_dimension_numbers<[1], [0], [0], [1], [0, 0, 1, 1], [], []>} : vector<128x32xf32>, vector<32x256xf32>, vector<128x256xf32> -> vector<128x256xf32>
    %c0_8 = arith.constant 0 : index
    %c0_9 = arith.constant 0 : index
    %20 = vector.load %arg5[%c0_8, %c0_9] : memref<128x1xf32, #tpu.memory_space<vmem>>, vector<128x1xf32>
    %21 = vector.broadcast %20 : vector<128x1xf32> to vector<128x256xf32>
    %22 = arith.addf %19, %21 : vector<128x256xf32>
    %cst_10 = arith.constant 0.000000e+00 : f32
    %23 = vector.broadcast %cst_10 : f32 to vector<128x256xf32>
    %24 = arith.maximumf %22, %23 : vector<128x256xf32>
    %c0_11 = arith.constant 0 : index
    %c0_12 = arith.constant 0 : index
    %25 = vector.load %arg6[%c0_11, %c0_12] : memref<1x128xf32, #tpu.memory_space<vmem>>, vector<1x128xf32>
    %cst_13 = arith.constant dense<0.000000e+00> : vector<1x256xf32>
    %26 = tpu.matmul %25, %24, %cst_13 {dimension_numbers = #tpu.dot_dimension_numbers<[1], [0], [0], [1], [0, 0, 1, 1], [], []>} : vector<1x128xf32>, vector<128x256xf32>, vector<1x256xf32> -> vector<1x256xf32>
    %c0_14 = arith.constant 0 : index
    %c0_15 = arith.constant 0 : index
    %27 = memref.load %arg7[%c0_14, %c0_15] : memref<1x1xf32, #tpu.memory_space<smem>>
    %28 = vector.broadcast %27 : f32 to vector<1x256xf32>
    %29 = arith.addf %26, %28 : vector<1x256xf32>
    %c0_16 = arith.constant 0 : index
    %c0_17 = arith.constant 0 : index
    %30 = vector.load %arg8[%c0_16, %c0_17] : memref<1x256xf32, #tpu.memory_space<vmem>>, vector<1x256xf32>
    tpu.vector_store %arg8[%c0_16, %c0_17], %29 {strides = array<i32>} : memref<1x256xf32, #tpu.memory_space<vmem>>, vector<1x256xf32>,
    return
  }
  func.func @transform_0(%arg0: i32) -> (i32, i32) {
    %c0_i32 = arith.constant 0 : i32
    %c0_i32_0 = arith.constant 0 : i32
    return %c0_i32, %arg0 : i32, i32
  }
  func.func @transform_1(%arg0: i32) -> (i32, i32) {
    %c0_i32 = arith.constant 0 : i32
    %c0_i32_0 = arith.constant 0 : i32
    %c0_i32_1 = arith.constant 0 : i32
    return %c0_i32, %c0_i32_0 : i32, i32
  }
  func.func @transform_2(%arg0: i32) -> (i32, i32) {
    %c0_i32 = arith.constant 0 : i32
    %c0_i32_0 = arith.constant 0 : i32
    %c0_i32_1 = arith.constant 0 : i32
    return %c0_i32, %c0_i32_0 : i32, i32
  }
  func.func @transform_3(%arg0: i32) -> (i32, i32) {
    %c0_i32 = arith.constant 0 : i32
    %c0_i32_0 = arith.constant 0 : i32
    %c0_i32_1 = arith.constant 0 : i32
    return %c0_i32, %c0_i32_0 : i32, i32
  }
  func.func @transform_4(%arg0: i32) -> (i32, i32) {
    %c0_i32 = arith.constant 0 : i32
    %c0_i32_0 = arith.constant 0 : i32
    %c0_i32_1 = arith.constant 0 : i32
    return %c0_i32, %c0_i32_0 : i32, i32
  }
  func.func @transform_5(%arg0: i32) -> (i32, i32) {
    %c0_i32 = arith.constant 0 : i32
    %c0_i32_0 = arith.constant 0 : i32
    %c0_i32_1 = arith.constant 0 : i32
    return %c0_i32, %c0_i32_0 : i32, i32
  }
  func.func @transform_6(%arg0: i32) -> (i32, i32) {
    %c0_i32 = arith.constant 0 : i32
    %c0_i32_0 = arith.constant 0 : i32
    %c0_i32_1 = arith.constant 0 : i32
    return %c0_i32, %c0_i32_0 : i32, i32
  }
  func.func @transform_7(%arg0: i32) -> (i32, i32) {
    %c0_i32 = arith.constant 0 : i32
    %c0_i32_0 = arith.constant 0 : i32
    return %c0_i32, %arg0 : i32, i32
  }
}

</mosaic_0001>

<llo_original>
// kernel: _net_b_forward_impl.1
$region0: #{_net_b_forward_impl.1}
  #allocation0 [shape = 'u32[]', space=smem, size = 0x4, offset = 0x4, fixed_abs, tag = 'smem constant byte address 0x4 - core index']
  #allocation1 [shape = 'u32[144,128]{1,0:T(1,128)}', space=vmem, size = 0x12000, scoped, tag = 'internal scratch']
  #allocation2 [shape = 'f32[1,1]{1,0:T(1,128)S(6)}', space=smem, size = 0x200, scoped, tag = 'scoped memory for _net_b_forward_impl.1']
  %s0 = inlined_call_operand.vmem [shape: f32[2,300], index: 0, kind: input, shape index: {}]
  %s1 = inlined_call_operand.vmem [shape: f32[32,2], index: 1, kind: input, shape index: {}]
  %s2 = inlined_call_operand.vmem [shape: f32[32,1], index: 2, kind: input, shape index: {}]
  %s3 = inlined_call_operand.vmem [shape: f32[128,32], index: 3, kind: input, shape index: {}]
  %s4 = inlined_call_operand.vmem [shape: f32[128,1], index: 4, kind: input, shape index: {}]
  %s5 = inlined_call_operand.vmem [shape: f32[1,128], index: 5, kind: input, shape index: {}]
  %s6 = inlined_call_operand.<no memory space> [shape: f32[1,1], index: 6, kind: input, shape index: {}]
  %s7 = inlined_call_operand.hbm [shape: f32[1,300], index: 7, kind: output, shape index: {}]
  %s8 = sld [smem:[#allocation0]]
  $region61: #{_net_b_forward_impl.1} parent=0
    _
  %s10 = ssub.s32 1, %s8
  %s11 = scalar_select 0, %s10, %s8
  %12 = sst [smem:[#allocation2]] %s6
  $region1: #{_net_b_forward_impl.1} parent=0
    #allocation3 [shape = 'u8[2048]{0}', space=vmem, size = 0x800, scoped, tag = 'output window, operand 0']
    #allocation4 [shape = 's32[2]{0}', space=sflag, size = 0x8, scoped, tag = 'scoped memory for _net_b_forward_impl.1']
    %13 = vsyncpa [#allocation4], 0
    %s14 = scalar_lea.sflag [#allocation4], 1
    %15 = vsyncpa %s14, 0
    loop: start=0, step=1, limit=4
    $region2: #{_net_b_forward_impl.1} parent=1 // loop_pre_header
      _
    $region3: #{_net_b_forward_impl.1} parent=1 // loop_header
      %s17 = sphi 0, %s21
      %p18 = scmp.ge.s32.totalorder %s17, 4
      %s27 = sphi 0, %s29
      %s30 = sphi 0, %s27
      %s31 = sphi 0, %s30
      %s47 = sphi 0, %s31
      %s51 = sphi 0, %s51
      %s53 = sphi 0, %s51
      %s54 = sphi 0, %s53
      %s68 = sphi 0, %s54
      %s72 = sphi 0, %s72
      %s74 = sphi 0, %s72
      %s75 = sphi 0, %s74
      %s89 = sphi 0, %s75
      %s93 = sphi 0, %s93
      %s95 = sphi 0, %s93
      %s96 = sphi 0, %s95
      %s110 = sphi 0, %s96
      %s114 = sphi 0, %s114
      %s116 = sphi 0, %s114
      %s117 = sphi 0, %s116
      %s131 = sphi 0, %s117
      %s135 = sphi 0, %s135
      %s137 = sphi 0, %s135
      %s138 = sphi 0, %s137
      %s152 = sphi 0, %s138
      %s156 = sphi 0, %s156
      %s158 = sphi 0, %s156
      %s159 = sphi 0, %s158
      %s173 = sphi 0, %s159
      %s179 = sphi 0, %s181
      %s182 = sphi 0, %s179
      %s183 = sphi 0, %s182
      %s199 = sphi 0, %s183
    $region4: #{_net_b_forward_impl.1} parent=1 // loop_header_branch
      %20 = sbr.rel (%p18) target = $region8
    $region5: #{_net_b_forward_impl.1} parent=1 // loop_body
      %s22 = ssub.s32 %s17, 1
      %s23 = ssub.s32 %s17, 2
      %s24 = sadd.s32 %s17, 1
      %s25 = ssub.s32 %s17, %s24
      %p26 = scmp.eq.s32.totalorder %s25, 0
      %s28 = sadd.s32 %s27, 1
      %s29 = scalar_select %p26, %s27, %s28
      %p32 = pneg %p26
      %p33 = scmp.eq.s32.totalorder %s17, 1
      %p34 = por %p32, %p33
      %p35 = scmp.ne.s32.totalorder %s27, %s30
      %p36 = scmp.eq.s32.totalorder %s17, 0
      %p37 = por %p35, %p36
      %p38 = scmp.ne.s32.totalorder %s27, %s30
      %p39 = scmp.eq.s32.totalorder %s22, 1
      %p40 = por %p38, %p39
      %p41 = scmp.ne.s32.totalorder %s30, %s31
      %p42 = scmp.eq.s32.totalorder %s22, 0
      %p43 = por %p41, %p42
      %p44 = scmp.ne.s32.totalorder %s30, %s31
      %p45 = scmp.eq.s32.totalorder %s23, 1
      %p46 = por %p44, %p45
      %p48 = scmp.ne.s32.totalorder %s31, %s47
      %p49 = scmp.eq.s32.totalorder %s23, 0
      %p50 = por %p48, %p49
      %s52 = sadd.s32 %s51, 1
      %p55 = scmp.eq.s32.totalorder %s17, 1
      %p56 = scmp.ne.s32.totalorder %s51, %s53
      %p57 = scmp.eq.s32.totalorder %s17, 0
      %p58 = por %p56, %p57
      %p59 = scmp.ne.s32.totalorder %s51, %s53
      %p60 = scmp.eq.s32.totalorder %s22, 1
      %p61 = por %p59, %p60
      %p62 = scmp.ne.s32.totalorder %s53, %s54
      %p63 = scmp.eq.s32.totalorder %s22, 0
      %p64 = por %p62, %p63
      %p65 = scmp.ne.s32.totalorder %s53, %s54
      %p66 = scmp.eq.s32.totalorder %s23, 1
      %p67 = por %p65, %p66
      %p69 = scmp.ne.s32.totalorder %s54, %s68
      %p70 = scmp.eq.s32.totalorder %s23, 0
      %p71 = por %p69, %p70
      %s73 = sadd.s32 %s72, 1
      %p76 = scmp.eq.s32.totalorder %s17, 1
      %p77 = scmp.ne.s32.totalorder %s72, %s74
      %p78 = scmp.eq.s32.totalorder %s17, 0
      %p79 = por %p77, %p78
      %p80 = scmp.ne.s32.totalorder %s72, %s74
      %p81 = scmp.eq.s32.totalorder %s22, 1
      %p82 = por %p80, %p81
      %p83 = scmp.ne.s32.totalorder %s74, %s75
      %p84 = scmp.eq.s32.totalorder %s22, 0
      %p85 = por %p83, %p84
      %p86 = scmp.ne.s32.totalorder %s74, %s75
      %p87 = scmp.eq.s32.totalorder %s23, 1
      %p88 = por %p86, %p87
      %p90 = scmp.ne.s32.totalorder %s75, %s89
      %p91 = scmp.eq.s32.totalorder %s23, 0
      %p92 = por %p90, %p91
      %s94 = sadd.s32 %s93, 1
      %p97 = scmp.eq.s32.totalorder %s17, 1
      %p98 = scmp.ne.s32.totalorder %s93, %s95
      %p99 = scmp.eq.s32.totalorder %s17, 0
      %p100 = por %p98, %p99
      %p101 = scmp.ne.s32.totalorder %s93, %s95
      %p102 = scmp.eq.s32.totalorder %s22, 1
      %p103 = por %p101, %p102
      %p104 = scmp.ne.s32.totalorder %s95, %s96
      %p105 = scmp.eq.s32.totalorder %s22, 0
      %p106 = por %p104, %p105
      %p107 = scmp.ne.s32.totalorder %s95, %s96
      %p108 = scmp.eq.s32.totalorder %s23, 1
      %p109 = por %p107, %p108
      %p111 = scmp.ne.s32.totalorder %s96, %s110
      %p112 = scmp.eq.s32.totalorder %s23, 0
      %p113 = por %p111, %p112
      %s115 = sadd.s32 %s114, 1
      %p118 = scmp.eq.s32.totalorder %s17, 1
      %p119 = scmp.ne.s32.totalorder %s114, %s116
      %p120 = scmp.eq.s32.totalorder %s17, 0
      %p121 = por %p119, %p120
      %p122 = scmp.ne.s32.totalorder %s114, %s116
      %p123 = scmp.eq.s32.totalorder %s22, 1
      %p124 = por %p122, %p123
      %p125 = scmp.ne.s32.totalorder %s116, %s117
      %p126 = scmp.eq.s32.totalorder %s22, 0
      %p127 = por %p125, %p126
      %p128 = scmp.ne.s32.totalorder %s116, %s117
      %p129 = scmp.eq.s32.totalorder %s23, 1
      %p130 = por %p128, %p129
      %p132 = scmp.ne.s32.totalorder %s117, %s131
      %p133 = scmp.eq.s32.totalorder %s23, 0
      %p134 = por %p132, %p133
      %s136 = sadd.s32 %s135, 1
      %p139 = scmp.eq.s32.totalorder %s17, 1
      %p140 = scmp.ne.s32.totalorder %s135, %s137
      %p141 = scmp.eq.s32.totalorder %s17, 0
      %p142 = por %p140, %p141
      %p143 = scmp.ne.s32.totalorder %s135, %s137
      %p144 = scmp.eq.s32.totalorder %s22, 1
      %p145 = por %p143, %p144
      %p146 = scmp.ne.s32.totalorder %s137, %s138
      %p147 = scmp.eq.s32.totalorder %s22, 0
      %p148 = por %p146, %p147
      %p149 = scmp.ne.s32.totalorder %s137, %s138
      %p150 = scmp.eq.s32.totalorder %s23, 1
      %p151 = por %p149, %p150
      %p153 = scmp.ne.s32.totalorder %s138, %s152
      %p154 = scmp.eq.s32.totalorder %s23, 0
      %p155 = por %p153, %p154
      %s157 = sadd.s32 %s156, 1
      %p160 = scmp.eq.s32.totalorder %s17, 1
      %p161 = scmp.ne.s32.totalorder %s156, %s158
      %p162 = scmp.eq.s32.totalorder %s17, 0
      %p163 = por %p161, %p162
      %p164 = scmp.ne.s32.totalorder %s156, %s158
      %p165 = scmp.eq.s32.totalorder %s22, 1
      %p166 = por %p164, %p165
      %p167 = scmp.ne.s32.totalorder %s158, %s159
      %p168 = scmp.eq.s32.totalorder %s22, 0
      %p169 = por %p167, %p168
      %p170 = scmp.ne.s32.totalorder %s158, %s159
      %p171 = scmp.eq.s32.totalorder %s23, 1
      %p172 = por %p170, %p171
      %p174 = scmp.ne.s32.totalorder %s159, %s173
      %p175 = scmp.eq.s32.totalorder %s23, 0
      %p176 = por %p174, %p175
      %s177 = ssub.s32 %s17, %s24
      %p178 = scmp.eq.s32.totalorder %s177, 0
      %s180 = sadd.s32 %s179, 1
      %s181 = scalar_select %p178, %s179, %s180
      %p184 = pneg %p178
      %p185 = scmp.eq.s32.totalorder %s17, 1
      %p186 = por %p184, %p185
      %p187 = scmp.ne.s32.totalorder %s179, %s182
      %p188 = scmp.eq.s32.totalorder %s17, 0
      %p189 = por %p187, %p188
      %p190 = scmp.ne.s32.totalorder %s179, %s182
      %p191 = scmp.eq.s32.totalorder %s22, 1
      %p192 = por %p190, %p191
      %p193 = scmp.ne.s32.totalorder %s182, %s183
      %p194 = scmp.eq.s32.totalorder %s22, 0
      %p195 = por %p193, %p194
      %p196 = scmp.ne.s32.totalorder %s182, %s183
      %p197 = scmp.eq.s32.totalorder %s23, 1
      %p198 = por %p196, %p197
      %p200 = scmp.ne.s32.totalorder %s183, %s199
      %p201 = scmp.eq.s32.totalorder %s23, 0
      %p202 = por %p200, %p201
      %p203 = scmp.le.s32.totalorder 1, %s17
      %p204 = scmp.lt.s32.totalorder %s17, 3
      %p205 = pnand %p203, %p204
      %p206 = pneg %p205
      // Predicated region
      $region9: #{_net_b_forward_impl.1} parent=5 // pred_check
        _
      $region10: #{_net_b_forward_impl.1} parent=5 // pred_check_branch
        %208 = sbr.rel (%p205) target = $region12
      $region11: #{_net_b_forward_impl.1} parent=5 // pred_region
        %s209 = ssub.s32 %s17, 1
        // Predicated region
        $region13: #{_net_b_forward_impl.1} parent=11 // pred_check
          %p210 = pneg %p64
        $region14: #{_net_b_forward_impl.1} parent=11 // pred_check_branch
          %212 = sbr.rel (%p210) target = $region16
        $region15: #{_net_b_forward_impl.1} parent=11 // pred_region
          _
        $region16: #{_net_b_forward_impl.1} parent=11 // pred_fallthru
          _
        // Predicated region
        $region17: #{_net_b_forward_impl.1} parent=11 // pred_check
          %p213 = pneg %p85
        $region18: #{_net_b_forward_impl.1} parent=11 // pred_check_branch
          %215 = sbr.rel (%p213) target = $region20
        $region19: #{_net_b_forward_impl.1} parent=11 // pred_region
          _
        $region20: #{_net_b_forward_impl.1} parent=11 // pred_fallthru
          _
        // Predicated region
        $region21: #{_net_b_forward_impl.1} parent=11 // pred_check
          %p216 = pneg %p106
        $region22: #{_net_b_forward_impl.1} parent=11 // pred_check_branch
          %218 = sbr.rel (%p216) target = $region24
        $region23: #{_net_b_forward_impl.1} parent=11 // pred_region
          _
        $region24: #{_net_b_forward_impl.1} parent=11 // pred_fallthru
          _
        // Predicated region
        $region25: #{_net_b_forward_impl.1} parent=11 // pred_check
          %p219 = pneg %p127
        $region26: #{_net_b_forward_impl.1} parent=11 // pred_check_branch
          %221 = sbr.rel (%p219) target = $region28
        $region27: #{_net_b_forward_impl.1} parent=11 // pred_region
          _
        $region28: #{_net_b_forward_impl.1} parent=11 // pred_fallthru
          _
        // Predicated region
        $region29: #{_net_b_forward_impl.1} parent=11 // pred_check
          %p222 = pneg %p148
        $region30: #{_net_b_forward_impl.1} parent=11 // pred_check_branch
          %224 = sbr.rel (%p222) target = $region32
        $region31: #{_net_b_forward_impl.1} parent=11 // pred_region
          _
        $region32: #{_net_b_forward_impl.1} parent=11 // pred_fallthru
          _
        // Predicated region
        $region33: #{_net_b_forward_impl.1} parent=11 // pred_check
          %p225 = pneg %p169
        $region34: #{_net_b_forward_impl.1} parent=11 // pred_check_branch
          %227 = sbr.rel (%p225) target = $region36
        $region35: #{_net_b_forward_impl.1} parent=11 // pred_region
          _
        $region36: #{_net_b_forward_impl.1} parent=11 // pred_fallthru
          _
      $region12: #{_net_b_forward_impl.1} parent=5 // pred_fallthru
        _
      %p228 = scmp.lt.s32.totalorder %s17, 2
      // Predicated region
      $region37: #{_net_b_forward_impl.1} parent=5 // pred_check
        %p229 = pneg %p228
      $region38: #{_net_b_forward_impl.1} parent=5 // pred_check_branch
        %231 = sbr.rel (%p229) target = $region40
      $region39: #{_net_b_forward_impl.1} parent=5 // pred_region
        // Predicated region
        $region41: #{_net_b_forward_impl.1} parent=39 // pred_check
          %p232 = pneg %p37
        $region42: #{_net_b_forward_impl.1} parent=39 // pred_check_branch
          %234 = sbr.rel (%p232) target = $region44
        $region43: #{_net_b_forward_impl.1} parent=39 // pred_region
          %s235 = smul.u32 2, %s17
          %s236 = ssub.s32 3, %s235
          %p237 = scmp.lt.s32.totalorder %s236, 2
          %s238 = scalar_select %p237, %s236, 2
          %s239 = smul.u32 32, %s238
          %p240 = scmp.lt.s32.totalorder %s235, 2
          %s241 = scalar_select %p240, %s235, 2
          %s242 = smul.addr %s241, 2
          %s243 = scalar_lea.vmem %s0, %s242
          %s244 = smul.u32 2, %s17
          %s245 = ssub.s32 3, %s244
          %p246 = scmp.lt.s32.totalorder %s245, 2
          %s247 = scalar_select %p246, %s245, 2
          %s248 = smul.u32 32, %s247
        $region44: #{_net_b_forward_impl.1} parent=39 // pred_fallthru
          _
      $region40: #{_net_b_forward_impl.1} parent=5 // pred_fallthru
        _
      %p249 = scmp.le.s32.totalorder 1, %s17
      %p250 = scmp.lt.s32.totalorder %s17, 3
      %p251 = pnand %p249, %p250
      %p252 = pneg %p251
      // Predicated region
      $region45: #{_net_b_forward_impl.1} parent=5 // pred_check
        _
      $region46: #{_net_b_forward_impl.1} parent=5 // pred_check_branch
        %254 = sbr.rel (%p251) target = $region48
      $region47: #{_net_b_forward_impl.1} parent=5 // pred_region
        %s255 = ssub.s32 %s17, 1
        %s256 = smul.u32 2, %s22
        %s257 = ssub.s32 3, %s256
        %p258 = scmp.lt.s32.totalorder %s257, 2
        %s259 = scalar_select %p258, %s257, 2
        %s260 = smul.u32 32, %s259
        %p261 = scmp.lt.s32.totalorder %s256, 2
        %s262 = scalar_select %p261, %s256, 2
        %s263 = smul.addr %s262, 2
        %s264 = scalar_lea.vmem %s0, %s263
        %p265 = pneg %p43
        %p266 = pneg %p40
        %p267 = pneg %p64
        %p268 = pneg %p61
        %p269 = pneg %p85
        %p270 = pneg %p82
        %p271 = pneg %p106
        %p272 = pneg %p103
        %p273 = pneg %p127
        %p274 = pneg %p124
        %p275 = pneg %p148
        %p276 = pneg %p145
        %p277 = pneg %p169
        %p278 = pneg %p166
        %p279 = pneg %p195
        %p280 = pneg %p192
        %s281 = sand.u32 %s182, 1
        %s282 = scalar_lea.sflag [#allocation4], %s281
        %s283 = sand.u32 %s182, 1
        %s284 = smul.addr %s283, 2
        %s285 = scalar_lea.vmem [#allocation3], %s284
        %s286 = smul.u32 2, %s22
        %s287 = ssub.s32 3, %s286
        %p288 = scmp.lt.s32.totalorder %s287, 2
        %s289 = scalar_select %p288, %s287, 2
        %s290 = smul.u32 32, %s289
        %p291 = scmp.lt.s32.totalorder %s286, 2
        %s292 = scalar_select %p291, %s286, 2
        %s293 = smul.addr %s292, 2
        %s294 = scalar_lea.vmem %s0, %s293
        %s295 = smul.u32 2, %s22
        %s296 = ssub.s32 3, %s295
        %p297 = scmp.lt.s32.totalorder %s296, 2
        %s298 = scalar_select %p297, %s296, 2
        %s299 = smul.u32 32, %s298
        %s300 = smul.u32 2, %s22
        %s301 = ssub.s32 3, %s300
        %p302 = scmp.lt.s32.totalorder %s301, 2
        %s303 = scalar_select %p302, %s301, 2
        %s304 = smul.u32 16, %s303
        %v305 = vld [vmem:[%s294] sm:$0xf]
        %v306 = vld [vmem:[%s1] sm:$0xff]
        %v307 = vld [vmem:[%s1 + $0x8] sm:$0xff]
        %v308 = vld [vmem:[%s1 + $0x10] sm:$0xff]
        %v309 = vld [vmem:[%s1 + $0x18] sm:$0xff]
        %311 = vset.pattern.permute.xlu0 0
        %312 = vperm.xlu0 %311, %v306
        %v313 = vpop.permute.xlu0 %312
        %316 = vset.pattern.permute.xlu0 0
        %317 = vperm.xlu0 %316, %v307
        %v318 = vpop.permute.xlu0 %317
        %321 = vset.pattern.permute.xlu0 0
        %322 = vperm.xlu0 %321, %v308
        %v323 = vpop.permute.xlu0 %322
        %326 = vset.pattern.permute.xlu0 0
        %327 = vperm.xlu0 %326, %v309
        %v328 = vpop.permute.xlu0 %327
        %v331 = vlaneseq
        %v332 = vshrl.u32 %v331, 7
        %v333 = vsub.s32 0, %v332
        %v334 = vrot.slane %v305, %v333
        %v335 = vlaneseq
        %v336 = vshrl.u32 %v335, 7
        %v337 = vsub.s32 2, %v336
        %v338 = vrot.slane %v305, %v337
        %v341 = vlaneseq
        %v342 = vshrl.u32 %v341, 7
        %v343 = vsub.s32 0, %v342
        %v344 = vrot.slane %v334, %v343
        %v345 = vlaneseq
        %v346 = vshrl.u32 %v345, 7
        %v347 = vsub.s32 0, %v346
        %v348 = vrot.slane %v338, %v347
        %v349 = vmul.f32 %v313, %v344
        %v350 = vmul.f32 %v313, %v348
        %v351 = vmul.f32 %v318, %v344
        %v352 = vmul.f32 %v318, %v348
        %v353 = vmul.f32 %v323, %v344
        %v354 = vmul.f32 %v323, %v348
        %v355 = vmul.f32 %v328, %v344
        %v356 = vmul.f32 %v328, %v348
        %357 = vset.pattern.permute.xlu0 1
        %358 = vperm.xlu0 %357, %v306
        %v359 = vpop.permute.xlu0 %358
        %361 = vset.pattern.permute.xlu0 1
        %362 = vperm.xlu0 %361, %v307
        %v363 = vpop.permute.xlu0 %362
        %365 = vset.pattern.permute.xlu0 1
        %366 = vperm.xlu0 %365, %v308
        %v367 = vpop.permute.xlu0 %366
        %369 = vset.pattern.permute.xlu0 1
        %370 = vperm.xlu0 %369, %v309
        %v371 = vpop.permute.xlu0 %370
        %v373 = vlaneseq
        %v374 = vshrl.u32 %v373, 7
        %v375 = vsub.s32 1, %v374
        %v376 = vrot.slane %v305, %v375
        %v377 = vlaneseq
        %v378 = vshrl.u32 %v377, 7
        %v379 = vsub.s32 3, %v378
        %v380 = vrot.slane %v305, %v379
        %v383 = vlaneseq
        %v384 = vshrl.u32 %v383, 7
        %v385 = vsub.s32 1, %v384
        %v386 = vrot.slane %v376, %v385
        %v387 = vlaneseq
        %v388 = vshrl.u32 %v387, 7
        %v389 = vsub.s32 1, %v388
        %v390 = vrot.slane %v380, %v389
        %v391 = vmul.f32 %v359, %v386
        %v392 = vmul.f32 %v359, %v390
        %v393 = vmul.f32 %v363, %v386
        %v394 = vmul.f32 %v363, %v390
        %v395 = vmul.f32 %v367, %v386
        %v396 = vmul.f32 %v367, %v390
        %v397 = vmul.f32 %v371, %v386
        %v398 = vmul.f32 %v371, %v390
        %v399 = vadd.f32 %v349, %v391
        %v400 = vadd.f32 %v350, %v392
        %v401 = vadd.f32 %v351, %v393
        %v402 = vadd.f32 %v352, %v394
        %v403 = vadd.f32 %v353, %v395
        %v404 = vadd.f32 %v354, %v396
        %v405 = vadd.f32 %v355, %v397
        %v406 = vadd.f32 %v356, %v398
        %v407 = vld [vmem:[%s2] sm:$0xff]
        %v408 = vld [vmem:[%s2 + $0x8] sm:$0xff]
        %v409 = vld [vmem:[%s2 + $0x10] sm:$0xff]
        %v410 = vld [vmem:[%s2 + $0x18] sm:$0xff]
        %412 = vset.pattern.permute.xlu0 0
        %413 = vperm.xlu0 %412, %v407
        %v414 = vpop.permute.xlu0 %413
        %417 = vset.pattern.permute.xlu0 0
        %418 = vperm.xlu0 %417, %v408
        %v419 = vpop.permute.xlu0 %418
        %422 = vset.pattern.permute.xlu0 0
        %423 = vperm.xlu0 %422, %v409
        %v424 = vpop.permute.xlu0 %423
        %427 = vset.pattern.permute.xlu0 0
        %428 = vperm.xlu0 %427, %v410
        %v429 = vpop.permute.xlu0 %428
        %v431 = vadd.f32 %v399, %v414
        %v432 = vadd.f32 %v400, %v414
        %v433 = vadd.f32 %v401, %v419
        %v434 = vadd.f32 %v402, %v419
        %v435 = vadd.f32 %v403, %v424
        %v436 = vadd.f32 %v404, %v424
        %v437 = vadd.f32 %v405, %v429
        %v438 = vadd.f32 %v406, %v429
        %v439 = vmax.f32 %v431, 0.0
        %v440 = vmax.f32 %v432, 0.0
        %v441 = vmax.f32 %v433, 0.0
        %v442 = vmax.f32 %v434, 0.0
        %v443 = vmax.f32 %v435, 0.0
        %v444 = vmax.f32 %v436, 0.0
        %v445 = vmax.f32 %v437, 0.0
        %v446 = vmax.f32 %v438, 0.0
        %v447 = vld [vmem:[%s3] sm:$0xff]
        %v448 = vld [vmem:[%s3 + $0x8] sm:$0xff]
        %v449 = vld [vmem:[%s3 + $0x10] sm:$0xff]
        %v450 = vld [vmem:[%s3 + $0x18] sm:$0xff]
        %v451 = vld [vmem:[%s3 + $0x20] sm:$0xff]
        %v452 = vld [vmem:[%s3 + $0x28] sm:$0xff]
        %v453 = vld [vmem:[%s3 + $0x30] sm:$0xff]
        %v454 = vld [vmem:[%s3 + $0x38] sm:$0xff]
        %v455 = vld [vmem:[%s3 + $0x40] sm:$0xff]
        %v456 = vld [vmem:[%s3 + $0x48] sm:$0xff]
        %v457 = vld [vmem:[%s3 + $0x50] sm:$0xff]
        %v458 = vld [vmem:[%s3 + $0x58] sm:$0xff]
        %v459 = vld [vmem:[%s3 + $0x60] sm:$0xff]
        %v460 = vld [vmem:[%s3 + $0x68] sm:$0xff]
        %v461 = vld [vmem:[%s3 + $0x70] sm:$0xff]
        %v462 = vld [vmem:[%s3 + $0x78] sm:$0xff]
        %v463 = vld [vmem:[%s4] sm:$0xff]
        %v464 = vld [vmem:[%s4 + $0x8] sm:$0xff]
        %v465 = vld [vmem:[%s4 + $0x10] sm:$0xff]
        %v466 = vld [vmem:[%s4 + $0x18] sm:$0xff]
        %v467 = vld [vmem:[%s4 + $0x20] sm:$0xff]
        %v468 = vld [vmem:[%s4 + $0x28] sm:$0xff]
        %v469 = vld [vmem:[%s4 + $0x30] sm:$0xff]
        %v470 = vld [vmem:[%s4 + $0x38] sm:$0xff]
        %v471 = vld [vmem:[%s4 + $0x40] sm:$0xff]
        %v472 = vld [vmem:[%s4 + $0x48] sm:$0xff]
        %v473 = vld [vmem:[%s4 + $0x50] sm:$0xff]
        %v474 = vld [vmem:[%s4 + $0x58] sm:$0xff]
        %v475 = vld [vmem:[%s4 + $0x60] sm:$0xff]
        %v476 = vld [vmem:[%s4 + $0x68] sm:$0xff]
        %v477 = vld [vmem:[%s4 + $0x70] sm:$0xff]
        %v478 = vld [vmem:[%s4 + $0x78] sm:$0xff]
        %480 = vset.pattern.permute.xlu0 0
        %481 = vperm.xlu0 %480, %v463
        %v482 = vpop.permute.xlu0 %481
        %485 = vset.pattern.permute.xlu0 0
        %486 = vperm.xlu0 %485, %v464
        %v487 = vpop.permute.xlu0 %486
        %490 = vset.pattern.permute.xlu0 0
        %491 = vperm.xlu0 %490, %v465
        %v492 = vpop.permute.xlu0 %491
        %495 = vset.pattern.permute.xlu0 0
        %496 = vperm.xlu0 %495, %v466
        %v497 = vpop.permute.xlu0 %496
        %500 = vset.pattern.permute.xlu0 0
        %501 = vperm.xlu0 %500, %v467
        %v502 = vpop.permute.xlu0 %501
        %505 = vset.pattern.permute.xlu0 0
        %506 = vperm.xlu0 %505, %v468
        %v507 = vpop.permute.xlu0 %506
        %510 = vset.pattern.permute.xlu0 0
        %511 = vperm.xlu0 %510, %v469
        %v512 = vpop.permute.xlu0 %511
        %515 = vset.pattern.permute.xlu0 0
        %516 = vperm.xlu0 %515, %v470
        %v517 = vpop.permute.xlu0 %516
        %520 = vset.pattern.permute.xlu0 0
        %521 = vperm.xlu0 %520, %v471
        %v522 = vpop.permute.xlu0 %521
        %525 = vset.pattern.permute.xlu0 0
        %526 = vperm.xlu0 %525, %v472
        %v527 = vpop.permute.xlu0 %526
        %530 = vset.pattern.permute.xlu0 0
        %531 = vperm.xlu0 %530, %v473
        %v532 = vpop.permute.xlu0 %531
        %535 = vset.pattern.permute.xlu0 0
        %536 = vperm.xlu0 %535, %v474
        %v537 = vpop.permute.xlu0 %536
        %540 = vset.pattern.permute.xlu0 0
        %541 = vperm.xlu0 %540, %v475
        %v542 = vpop.permute.xlu0 %541
        %545 = vset.pattern.permute.xlu0 0
        %546 = vperm.xlu0 %545, %v476
        %v547 = vpop.permute.xlu0 %546
        %550 = vset.pattern.permute.xlu0 0
        %551 = vperm.xlu0 %550, %v477
        %v552 = vpop.permute.xlu0 %551
        %555 = vset.pattern.permute.xlu0 0
        %556 = vperm.xlu0 %555, %v478
        %v557 = vpop.permute.xlu0 %556
        %vm559 = vcmask 261120
        %v561 = vsel %vm559, %v447, 0
        %v564 = vsel %vm559, %v448, 0
        %v567 = vsel %vm559, %v449, 0
        %v570 = vsel %vm559, %v450, 0
        %v573 = vsel %vm559, %v451, 0
        %v576 = vsel %vm559, %v452, 0
        %v579 = vsel %vm559, %v453, 0
        %v582 = vsel %vm559, %v454, 0
        %v585 = vsel %vm559, %v455, 0
        %v588 = vsel %vm559, %v456, 0
        %v591 = vsel %vm559, %v457, 0
        %v594 = vsel %vm559, %v458, 0
        %v597 = vsel %vm559, %v459, 0
        %v600 = vsel %vm559, %v460, 0
        %v603 = vsel %vm559, %v461, 0
        %v606 = vsel %vm559, %v462, 0
        %608 = vmatprep.subr.mxu0 0.0
        %609 = vmatpush1.msra.mxu0 0.0
        %610 = vmatprep.subr.mxu0 0.0
        %611 = vmatpush1.msra.mxu0 0.0
        %612 = vmatprep.subr.mxu0 0.0
        %613 = vmatpush1.msra.mxu0 0.0
        %614 = vmatprep.subr.mxu0 0.0
        %615 = vmatpush1.msra.mxu0 0.0
        %616 = vmatprep.subr.mxu0 0.0
        %617 = vmatpush1.msra.mxu0 0.0
        %618 = vmatprep.subr.mxu0 0.0
        %619 = vmatpush1.msra.mxu0 0.0
        %620 = vmatprep.subr.mxu0 0.0
        %621 = vmatpush1.msra.mxu0 0.0
        %622 = vmatprep.subr.mxu0 0.0
        %623 = vmatpush1.msra.mxu0 0.0
        %624 = vmatprep.subr.mxu0 0.0
        %625 = vmatpush1.msra.mxu0 0.0
        %626 = vmatprep.subr.mxu0 0.0
        %627 = vmatpush1.msra.mxu0 0.0
        %628 = vmatprep.subr.mxu0 0.0
        %629 = vmatpush1.msra.mxu0 0.0
        %630 = vmatprep.subr.mxu0 0.0
        %631 = vmatpush1.msra.mxu0 0.0
        %632 = vmatprep.subr.mxu0 %v446
        %633 = vmatpush1.msra.mxu0 %v445
        %634 = vmatprep.subr.mxu0 %v444
        %635 = vmatpush1.msra.mxu0 %v443
        %636 = vmatprep.subr.mxu0 %v442
        %637 = vmatpush1.msra.mxu0 %v441
        %638 = vmatprep.subr.mxu0 %v440
        %639 = vmatpush1.msra.mxu0 %v439
        %640 = vmatprep.subr.mxu0 0.0
        %641 = vmatpush2.msra.mxu0 0.0
        %642 = vmatprep.subr.mxu0 0.0
        %643 = vmatpush2.msra.mxu0 0.0
        %644 = vmatprep.subr.mxu0 0.0
        %645 = vmatpush2.msra.mxu0 0.0
        %646 = vmatprep.subr.mxu0 0.0
        %647 = vmatpush2.msra.mxu0 0.0
        %648 = vmatprep.subr.mxu0 0.0
        %649 = vmatpush2.msra.mxu0 0.0
        %650 = vmatprep.subr.mxu0 0.0
        %651 = vmatpush2.msra.mxu0 0.0
        %652 = vmatprep.subr.mxu0 0.0
        %653 = vmatpush2.msra.mxu0 0.0
        %654 = vmatprep.subr.mxu0 0.0
        %655 = vmatpush2.msra.mxu0 0.0
        %656 = vmatprep.subr.mxu0 0.0
        %657 = vmatpush2.msra.mxu0 0.0
        %658 = vmatprep.subr.mxu0 0.0
        %659 = vmatpush2.msra.mxu0 0.0
        %660 = vmatprep.subr.mxu0 0.0
        %661 = vmatpush2.msra.mxu0 0.0
        %662 = vmatprep.subr.mxu0 0.0
        %663 = vmatpush2.msra.mxu0 0.0
        %664 = vmatprep.subr.mxu0 0.0
        %665 = vmatpush2.msra.mxu0 0.0
        %666 = vmatprep.subr.mxu0 0.0
        %667 = vmatpush2.msra.mxu0 0.0
        %668 = vmatprep.subr.mxu0 0.0
        %669 = vmatpush2.msra.mxu0 0.0
        %670 = vmatprep.subr.mxu0 0.0
        %671 = vmatpush2.msra.mxu0 0.0
        %672 = vmatprep.mubr.f32.mxu0 0.0
        %673 = vmatmul.mubr.f32.gmra.mxu0 %v561
        %v674 = vpop.f32.mrf.mxu0
        %v675 = vadd.f32 %v482, %v674
        %v676 = vpop.f32.mrf.mxu0
        %v677 = vadd.f32 %v482, %v676
        %678 = vmatprep.mubr.f32.mxu0 0.0
        %679 = vmatmul.mubr.f32.gmra.mxu0 %v564
        %v680 = vpop.f32.mrf.mxu0
        %v681 = vadd.f32 %v487, %v680
        %v682 = vpop.f32.mrf.mxu0
        %v683 = vadd.f32 %v487, %v682
        %684 = vmatprep.mubr.f32.mxu0 0.0
        %685 = vmatmul.mubr.f32.gmra.mxu0 %v567
        %v686 = vpop.f32.mrf.mxu0
        %v687 = vadd.f32 %v492, %v686
        %v688 = vpop.f32.mrf.mxu0
        %v689 = vadd.f32 %v492, %v688
        %690 = vmatprep.mubr.f32.mxu0 0.0
        %691 = vmatmul.mubr.f32.gmra.mxu0 %v570
        %v692 = vpop.f32.mrf.mxu0
        %v693 = vadd.f32 %v497, %v692
        %v694 = vpop.f32.mrf.mxu0
        %v695 = vadd.f32 %v497, %v694
        %696 = vmatprep.mubr.f32.mxu0 0.0
        %697 = vmatmul.mubr.f32.gmra.mxu0 %v573
        %v698 = vpop.f32.mrf.mxu0
        %v699 = vadd.f32 %v502, %v698
        %v700 = vpop.f32.mrf.mxu0
        %v701 = vadd.f32 %v502, %v700
        %702 = vmatprep.mubr.f32.mxu0 0.0
        %703 = vmatmul.mubr.f32.gmra.mxu0 %v576
        %v704 = vpop.f32.mrf.mxu0
        %v705 = vadd.f32 %v507, %v704
        %v706 = vpop.f32.mrf.mxu0
        %v707 = vadd.f32 %v507, %v706
        %708 = vmatprep.mubr.f32.mxu0 0.0
        %709 = vmatmul.mubr.f32.gmra.mxu0 %v579
        %v710 = vpop.f32.mrf.mxu0
        %v711 = vadd.f32 %v512, %v710
        %v712 = vpop.f32.mrf.mxu0
        %v713 = vadd.f32 %v512, %v712
        %714 = vmatprep.mubr.f32.mxu0 0.0
        %715 = vmatmul.mubr.f32.gmra.mxu0 %v582
        %v716 = vpop.f32.mrf.mxu0
        %v717 = vadd.f32 %v517, %v716
        %v718 = vpop.f32.mrf.mxu0
        %v719 = vadd.f32 %v517, %v718
        %720 = vmatprep.mubr.f32.mxu0 0.0
        %721 = vmatmul.mubr.f32.gmra.mxu0 %v585
        %v722 = vpop.f32.mrf.mxu0
        %v723 = vadd.f32 %v522, %v722
        %v724 = vpop.f32.mrf.mxu0
        %v725 = vadd.f32 %v522, %v724
        %726 = vmatprep.mubr.f32.mxu0 0.0
        %727 = vmatmul.mubr.f32.gmra.mxu0 %v588
        %v728 = vpop.f32.mrf.mxu0
        %v729 = vadd.f32 %v527, %v728
        %v730 = vpop.f32.mrf.mxu0
        %v731 = vadd.f32 %v527, %v730
        %732 = vmatprep.mubr.f32.mxu0 0.0
        %733 = vmatmul.mubr.f32.gmra.mxu0 %v591
        %v734 = vpop.f32.mrf.mxu0
        %v735 = vadd.f32 %v532, %v734
        %v736 = vpop.f32.mrf.mxu0
        %v737 = vadd.f32 %v532, %v736
        %738 = vmatprep.mubr.f32.mxu0 0.0
        %739 = vmatmul.mubr.f32.gmra.mxu0 %v594
        %v740 = vpop.f32.mrf.mxu0
        %v741 = vadd.f32 %v537, %v740
        %v742 = vpop.f32.mrf.mxu0
        %v743 = vadd.f32 %v537, %v742
        %744 = vmatprep.mubr.f32.mxu0 0.0
        %745 = vmatmul.mubr.f32.gmra.mxu0 %v597
        %v746 = vpop.f32.mrf.mxu0
        %v747 = vadd.f32 %v542, %v746
        %v748 = vpop.f32.mrf.mxu0
        %v749 = vadd.f32 %v542, %v748
        %750 = vmatprep.mubr.f32.mxu0 0.0
        %751 = vmatmul.mubr.f32.gmra.mxu0 %v600
        %v752 = vpop.f32.mrf.mxu0
        %v753 = vadd.f32 %v547, %v752
        %v754 = vpop.f32.mrf.mxu0
        %v755 = vadd.f32 %v547, %v754
        %756 = vmatprep.mubr.f32.mxu0 0.0
        %757 = vmatmul.mubr.f32.gmra.mxu0 %v603
        %v758 = vpop.f32.mrf.mxu0
        %v759 = vadd.f32 %v552, %v758
        %v760 = vpop.f32.mrf.mxu0
        %v761 = vadd.f32 %v552, %v760
        %762 = vmatprep.mubr.f32.mxu0 0.0
        %763 = vmatmul.mubr.f32.gmra.mxu0 %v606
        %v764 = vpop.f32.mrf.mxu0
        %v765 = vadd.f32 %v557, %v764
        %v766 = vpop.f32.mrf.mxu0
        %v767 = vadd.f32 %v557, %v766
        %768 = vdwg.mxu0
        %v769 = vmax.f32 %v675, 0.0
        %v770 = vmax.f32 %v677, 0.0
        %v771 = vmax.f32 %v681, 0.0
        %v772 = vmax.f32 %v683, 0.0
        %v773 = vmax.f32 %v687, 0.0
        %v774 = vmax.f32 %v689, 0.0
        %v775 = vmax.f32 %v693, 0.0
        %v776 = vmax.f32 %v695, 0.0
        %v777 = vmax.f32 %v699, 0.0
        %v778 = vmax.f32 %v701, 0.0
        %v779 = vmax.f32 %v705, 0.0
        %v780 = vmax.f32 %v707, 0.0
        %v781 = vmax.f32 %v711, 0.0
        %v782 = vmax.f32 %v713, 0.0
        %v783 = vmax.f32 %v717, 0.0
        %v784 = vmax.f32 %v719, 0.0
        %v785 = vmax.f32 %v723, 0.0
        %v786 = vmax.f32 %v725, 0.0
        %v787 = vmax.f32 %v729, 0.0
        %v788 = vmax.f32 %v731, 0.0
        %v789 = vmax.f32 %v735, 0.0
        %v790 = vmax.f32 %v737, 0.0
        %v791 = vmax.f32 %v741, 0.0
        %v792 = vmax.f32 %v743, 0.0
        %v793 = vmax.f32 %v747, 0.0
        %v794 = vmax.f32 %v749, 0.0
        %v795 = vmax.f32 %v753, 0.0
        %v796 = vmax.f32 %v755, 0.0
        %v797 = vmax.f32 %v759, 0.0
        %v798 = vmax.f32 %v761, 0.0
        %v799 = vmax.f32 %v765, 0.0
        %v800 = vmax.f32 %v767, 0.0
        %v801 = vld [vmem:[%s5] sm:$0x1]
        %s802 = sld [smem:[#allocation2]]
        %v803 = vstv %s802
        %804 = vmatprep.subr.mxu0 %v800
        %805 = vmatpush1.msra.mxu0 %v799
        %806 = vmatprep.subr.mxu0 %v798
        %807 = vmatpush1.msra.mxu0 %v797
        %808 = vmatprep.subr.mxu0 %v796
        %809 = vmatpush1.msra.mxu0 %v795
        %810 = vmatprep.subr.mxu0 %v794
        %811 = vmatpush1.msra.mxu0 %v793
        %812 = vmatprep.subr.mxu0 %v792
        %813 = vmatpush1.msra.mxu0 %v791
        %814 = vmatprep.subr.mxu0 %v790
        %815 = vmatpush1.msra.mxu0 %v789
        %816 = vmatprep.subr.mxu0 %v788
        %817 = vmatpush1.msra.mxu0 %v787
        %818 = vmatprep.subr.mxu0 %v786
        %819 = vmatpush1.msra.mxu0 %v785
        %820 = vmatprep.subr.mxu0 %v784
        %821 = vmatpush1.msra.mxu0 %v783
        %822 = vmatprep.subr.mxu0 %v782
        %823 = vmatpush1.msra.mxu0 %v781
        %824 = vmatprep.subr.mxu0 %v780
        %825 = vmatpush1.msra.mxu0 %v779
        %826 = vmatprep.subr.mxu0 %v778
        %827 = vmatpush1.msra.mxu0 %v777
        %828 = vmatprep.subr.mxu0 %v776
        %829 = vmatpush1.msra.mxu0 %v775
        %830 = vmatprep.subr.mxu0 %v774
        %831 = vmatpush1.msra.mxu0 %v773
        %832 = vmatprep.subr.mxu0 %v772
        %833 = vmatpush1.msra.mxu0 %v771
        %834 = vmatprep.subr.mxu0 %v770
        %835 = vmatpush1.msra.mxu0 %v769
        %836 = vmatprep.subr.mxu0 0.0
        %837 = vmatpush2.msra.mxu0 0.0
        %838 = vmatprep.subr.mxu0 0.0
        %839 = vmatpush2.msra.mxu0 0.0
        %840 = vmatprep.subr.mxu0 0.0
        %841 = vmatpush2.msra.mxu0 0.0
        %842 = vmatprep.subr.mxu0 0.0
        %843 = vmatpush2.msra.mxu0 0.0
        %844 = vmatprep.subr.mxu0 0.0
        %845 = vmatpush2.msra.mxu0 0.0
        %846 = vmatprep.subr.mxu0 0.0
        %847 = vmatpush2.msra.mxu0 0.0
        %848 = vmatprep.subr.mxu0 0.0
        %849 = vmatpush2.msra.mxu0 0.0
        %850 = vmatprep.subr.mxu0 0.0
        %851 = vmatpush2.msra.mxu0 0.0
        %852 = vmatprep.subr.mxu0 0.0
        %853 = vmatpush2.msra.mxu0 0.0
        %854 = vmatprep.subr.mxu0 0.0
        %855 = vmatpush2.msra.mxu0 0.0
        %856 = vmatprep.subr.mxu0 0.0
        %857 = vmatpush2.msra.mxu0 0.0
        %858 = vmatprep.subr.mxu0 0.0
        %859 = vmatpush2.msra.mxu0 0.0
        %860 = vmatprep.subr.mxu0 0.0
        %861 = vmatpush2.msra.mxu0 0.0
        %862 = vmatprep.subr.mxu0 0.0
        %863 = vmatpush2.msra.mxu0 0.0
        %864 = vmatprep.subr.mxu0 0.0
        %865 = vmatpush2.msra.mxu0 0.0
        %866 = vmatprep.subr.mxu0 0.0
        %867 = vmatpush2.msra.mxu0 0.0
        %868 = vmatprep.mubr.f32.mxu0 0.0
        %869 = vmatmul.mubr.f32.gmra.mxu0 %v801
        %v870 = vpop.f32.mrf.mxu0
        %v871 = vadd.f32 %v803, %v870
        %v872 = vpop.f32.mrf.mxu0
        %v873 = vadd.f32 %v803, %v872
        %874 = vdwg.mxu0
        %v877 = vcombine.low %v871, %v873
        %v879 = vunpack.c.l.s4 1966171168
        %v880 = vunpack.c.0.s8 %v879
        %v881 = vlaneseq
        %v882 = vshrl.u32 %v881, 7
        %v883 = vsub.s32 %v880, %v882
        %v884 = vrot.slane %v877, %v883
        %v886 = vunpack.c.l.s4 1966171168
        %v887 = vunpack.c.0.s8 %v886
        %v888 = vlaneseq
        %v889 = vshrl.u32 %v888, 7
        %v890 = vsub.s32 %v887, %v889
        %v891 = vrot.slane %v884, %v890
        %v893 = vlaneseq
        %vm894 = vcmp.ge.s32.totalorder %v893, 0
        %vm895 = vcmp.lt.s32.totalorder %v893, 256
        %vm896 = vmand %vm894, %vm895
        %897 = vst.msk [vmem:[%s285] sm:$0x3] %vm896, %v891
        %s898 = sand.u32 %s182, 1
        %s899 = scalar_lea.sflag [#allocation4], %s898
        %s900 = sand.u32 %s182, 1
        %s901 = smul.addr %s900, 2
        %s902 = scalar_lea.vmem [#allocation3], %s901
        // Predicated region
        $region49: #{_net_b_forward_impl.1} parent=47 // pred_check
          %p903 = pneg %p192
        $region50: #{_net_b_forward_impl.1} parent=47 // pred_check_branch
          %905 = sbr.rel (%p903) target = $region52
        $region51: #{_net_b_forward_impl.1} parent=47 // pred_region
          %s906 = smul.u32 2, %s22
          %s907 = ssub.s32 3, %s906
          %p908 = scmp.lt.s32.totalorder %s907, 2
          %s909 = scalar_select %p908, %s907, 2
          %s910 = smul.u32 16, %s909
          %s912 = ssub.s32 32, %s910
          %913 = vsyncadd %s899, %s912
          %p914 = scmp.ne.s32.totalorder 0, %s910
          %s915 = smul.addr %s906, 16
          %s916 = scalar_lea.hbm %s7, %s915
          %s917 = sshll.u32 %s909, 4
          %s918 = sshll.u32 %s902, 4
          %s919 = int_to_ptr.vmem [resolvable:$true] %s918
          %921 = dma.vmem_to_hbm [thread:$0]  (%p914), %s919, %s917, %s916, %s899
        $region52: #{_net_b_forward_impl.1} parent=47 // pred_fallthru
          _
      $region48: #{_net_b_forward_impl.1} parent=5 // pred_fallthru
        _
      %p922 = scmp.le.s32.totalorder 2, %s17
      // Predicated region
      $region53: #{_net_b_forward_impl.1} parent=5 // pred_check
        %p923 = pneg %p922
      $region54: #{_net_b_forward_impl.1} parent=5 // pred_check_branch
        %925 = sbr.rel (%p923) target = $region56
      $region55: #{_net_b_forward_impl.1} parent=5 // pred_region
        %s926 = ssub.s32 %s17, 2
        // Predicated region
        $region57: #{_net_b_forward_impl.1} parent=55 // pred_check
          %p927 = pneg %p198
        $region58: #{_net_b_forward_impl.1} parent=55 // pred_check_branch
          %929 = sbr.rel (%p927) target = $region60
        $region59: #{_net_b_forward_impl.1} parent=55 // pred_region
          %s930 = sand.u32 %s183, 1
          %s931 = scalar_lea.sflag [#allocation4], %s930
          %s932 = sand.u32 %s183, 1
          %s933 = smul.addr %s932, 2
          %s934 = scalar_lea.vmem [#allocation3], %s933
          %935 = dma.done %s931, 32
        $region60: #{_net_b_forward_impl.1} parent=55 // pred_fallthru
          _
      $region56: #{_net_b_forward_impl.1} parent=5 // pred_fallthru
        _
    $region6: #{_net_b_forward_impl.1} parent=1 // loop_footer
      %s21 = sadd.s32 1, %s17
    $region7: #{_net_b_forward_impl.1} parent=1 // loop_footer_branch
      %16 = sbr.rel target = $region3
    $region8: #{_net_b_forward_impl.1} parent=1 // loop_exit
      _
    %936 = vsyncpa [#allocation4], 1
    %s937 = scalar_lea.sflag [#allocation4], 1
    %938 = vsyncpa %s937, 1

</llo_original>
